<compile_context>
chip_gen: v7x
topology: tpu7x:2x2x1
jax: 0.10.0
libtpu: 0.0.40
codegen_flags: <defaults>
</compile_context>

<pallas_src>
import functools

import jax
import jax.numpy as jnp
from jax.experimental import pallas as pl
from jax.experimental.pallas import tpu as pltpu


def _round_up(n, m):
    return ((n + m - 1) // m) * m


def _critic_kernel(x_ref, w1_ref, b1_ref, w2_ref, b2_ref, o_ref):
    """One batch tile: h = relu(x @ W1 + b1); y = sum(h * w2_row) + b2."""
    w1 = w1_ref[...]                                        # (D_in, Hp), f32 or bf16
    x = x_ref[...].astype(w1.dtype)                         # MXU-native dtype if bf16
    # Layer 1 on the MXU, f32 accumulate.
    h = jnp.dot(x, w1, preferred_element_type=jnp.float32)  # (TB, Hp) f32
    h = jnp.maximum(h + b1_ref[...].astype(jnp.float32), 0.0)   # bias + ReLU (VPU)
    # Layer 2 (out_features == 1): VPU multiply + lane reduce instead of an N=1 matmul.
    w2_row = w2_ref[...].astype(jnp.float32)                # (1, Hp)
    y = jnp.sum(h * w2_row, axis=-1)                        # (TB,)
    y = y + b2_ref[0, 0]                                    # scalar bias from SMEM
    # Lane-dense store: batch lives on the lane axis of the (1, 1, TB) output block.
    o_ref[...] = y[None, None, :].astype(o_ref.dtype)


def critic_forward(x, w1, b1, w2, b2, *, block_b=None):
    """Critic forward pass.

    x : (B, D_in) f32
    w1: (D_in, H)  f32 or bf16 (stored transposed vs PyTorch -> kernel does x @ W1)
    b1: (1, H)     f32
    w2: (H, 1)     f32
    b2: (1, 1)     f32
    Returns (B, 1) f32.
    """
    B, d_in = x.shape
    H = w1.shape[1]

    # Pad the hidden dim to a lane multiple. Zero-padded columns give
    # relu(0 + 0) * 0 = 0, so the result is unchanged while all per-element
    # vector ops in the kernel become unmasked / lane-dense.
    h_pad = _round_up(H, 128)
    b1_row = b1.reshape(1, H).astype(jnp.float32)
    w2_row = w2.reshape(1, H).astype(jnp.float32)
    if h_pad != H:
        w1 = jnp.pad(w1, ((0, 0), (0, h_pad - H)))
        b1_row = jnp.pad(b1_row, ((0, 0), (0, h_pad - H)))
        w2_row = jnp.pad(w2_row, ((0, 0), (0, h_pad - H)))
    b2_s = b2.reshape(1, 1).astype(jnp.float32)

    if block_b is None:
        # Budget: 2 double-buffered (TB, D_in) f32 x tiles + the (TB, Hp) f32 hidden
        # activation + 2 (TB,) output buffers within ~12 MiB, leaving plenty of
        # headroom under v7x's 32 MiB scoped-VMEM default for the resident weights.
        bytes_per_row = 4 * (2 * d_in + h_pad) + 16
        block_b = max(128, min(1024, (12 << 20) // bytes_per_row))

    eff = min(block_b, max(B, 1))
    align = 128 if eff >= 128 else 8          # 128 -> unmasked lane-dense output store
    tb = _round_up(eff, align)
    g = pl.cdiv(B, tb)
    b_pad = g * tb
    if b_pad != B:
        x = jnp.pad(x, ((0, b_pad - B), (0, 0)))

    cost = pl.CostEstimate(
        flops=2 * b_pad * d_in * h_pad + 3 * b_pad * h_pad,
        transcendentals=0,
        bytes_accessed=int(x.size * x.dtype.itemsize
                           + w1.size * w1.dtype.itemsize
                           + 2 * h_pad * 4
                           + b_pad * 4),
    )

    out = pl.pallas_call(
        _critic_kernel,
        out_shape=jax.ShapeDtypeStruct((g, 1, tb), jnp.float32),
        grid=(g,),
        in_specs=[
            # x: streamed per batch tile (double-buffered by the Pallas pipeline).
            pl.BlockSpec((tb, d_in), lambda i: (i, 0)),
            # Weights / biases: same block every step -> stay VMEM-resident.
            pl.BlockSpec((d_in, h_pad), lambda i: (0, 0)),
            pl.BlockSpec((1, h_pad), lambda i: (0, 0)),
            pl.BlockSpec((1, h_pad), lambda i: (0, 0)),
            # b2: scalar in SMEM (avoids a padded (8,128) VMEM tile for a 1x1 value).
            pl.BlockSpec(memory_space=pltpu.MemorySpace.SMEM),
        ],
        out_specs=pl.BlockSpec((1, 1, tb), lambda i: (i, 0, 0)),
        compiler_params=pltpu.CompilerParams(
            # Batch tiles are independent -> shard across v7x's 2 TensorCores.
            dimension_semantics=("parallel",),
        ),
        cost_estimate=cost,
    )(x, w1, b1_row, w2_row, b2_s)

    # (G, 1, TB) lane-dense slab -> (B, 1) column, padding rows dropped.
    return out.reshape(b_pad, 1)[:B]


def init_critic_params(key, input_size, hidden_dim=64, dtype=jnp.float32):
    """Deterministic init mimicking nn.Linear's default U(-1/sqrt(fan_in), 1/sqrt(fan_in))."""
    k1, k2, k3, k4 = jax.random.split(key, 4)
    bound1 = 1.0 / jnp.sqrt(jnp.asarray(input_size, dtype))
    bound2 = 1.0 / jnp.sqrt(jnp.asarray(hidden_dim, dtype))
    # Stored transposed vs PyTorch (out_features last) so the kernel does x @ W.
    w1 = jax.random.uniform(k1, (input_size, hidden_dim), dtype, -bound1, bound1)
    b1 = jax.random.uniform(k2, (1, hidden_dim), dtype, -bound1, bound1)
    w2 = jax.random.uniform(k3, (hidden_dim, 1), dtype, -bound2, bound2)
    b2 = jax.random.uniform(k4, (1, 1), dtype, -bound2, bound2)
    return w1, b1, w2, b2


if __name__ == "__main__":
    key = jax.random.PRNGKey(0)
    k_x, k_p = jax.random.split(key)

    batch = 16          # small demo shapes; block_b=8 -> a 2-tile batch grid
    input_size = 32
    hidden_dim = 64     # TODO(synk): at these toy sizes the kernel is launch-overhead
    #                     bound; in production fuse this value head into the caller's
    #                     kernel (it is a single MXU dot + a lane reduce).

    x = jax.random.normal(k_x, (batch, input_size), dtype=jnp.float32)
    w1, b1, w2, b2 = init_critic_params(k_p, input_size, hidden_dim)
    ref = jnp.maximum(x @ w1 + b1, 0.0) @ w2 + b2

    # f32 path, explicit small tile — exercises the batch grid (2 tiles), resident
    # weights, hidden-dim lane padding, and the SMEM scalar bias.
    fwd_small = jax.jit(functools.partial(critic_forward, block_b=8))
    out = jax.block_until_ready(fwd_small(x, w1, b1, w2, b2))
    assert out.shape == (batch, 1)
    assert jnp.allclose(out, ref, atol=1e-5, rtol=1e-5)

    # Default (VMEM-budgeted) tile path.
    fwd_auto = jax.jit(critic_forward)
    out_auto = jax.block_until_ready(fwd_auto(x, w1, b1, w2, b2))
    assert out_auto.shape == (batch, 1)
    assert jnp.allclose(out_auto, ref, atol=1e-5, rtol=1e-5)

    # bf16-weight path — MXU-native inputs for layer 1, f32 accumulate/bias/ReLU.
    out_bf16 = jax.block_until_ready(fwd_small(x, w1.astype(jnp.bfloat16), b1, w2, b2))
    assert out_bf16.shape == (batch, 1)
    assert jnp.allclose(out_bf16, ref, atol=5e-2, rtol=5e-2)

    print("KERNEL_OK")
</pallas_src>

<mosaic_0001>
module attributes {stable_mosaic.version = 11 : i64} {
  func.func @_critic_kernel(%arg0: i32, %arg1: memref<8x32xf32, #tpu.memory_space<vmem>>, %arg2: memref<32x128xf32, #tpu.memory_space<vmem>>, %arg3: memref<1x128xf32, #tpu.memory_space<vmem>>, %arg4: memref<1x128xf32, #tpu.memory_space<vmem>>, %arg5: memref<1x1xf32, #tpu.memory_space<smem>>, %arg6: memref<1x1x8xf32, #tpu.memory_space<vmem>>) attributes {dimension_semantics = [#tpu.dimension_semantics<parallel>], iteration_bounds = array<i64: 2>, scalar_prefetch = 0 : i64, scratch_operands = 0 : i64, tpu.core_type = #tpu.core_type<tc>, window_params = [{transform_indices = @transform_0, window_bounds = array<i64: 8, 32>}, {pipeline_mode = #tpu.pipeline_mode<synchronous>, transform_indices = @transform_1, window_bounds = array<i64: 32, 128>}, {pipeline_mode = #tpu.pipeline_mode<synchronous>, transform_indices = @transform_2, window_bounds = array<i64: 1, 128>}, {pipeline_mode = #tpu.pipeline_mode<synchronous>, transform_indices = @transform_3, window_bounds = array<i64: 1, 128>}, {transform_indices = @transform_4, window_bounds = array<i64: 1, 1>}, {transform_indices = @transform_5, window_bounds = array<i64: 1, 1, 8>}]} {
    %c0 = arith.constant 0 : index
    %c0_0 = arith.constant 0 : index
    %0 = vector.load %arg2[%c0, %c0_0] : memref<32x128xf32, #tpu.memory_space<vmem>>, vector<32x128xf32>
    %c0_1 = arith.constant 0 : index
    %c0_2 = arith.constant 0 : index
    %1 = vector.load %arg1[%c0_1, %c0_2] : memref<8x32xf32, #tpu.memory_space<vmem>>, vector<8x32xf32>
    %cst = arith.constant dense<0.000000e+00> : vector<8x128xf32>
    %2 = tpu.matmul %1, %0, %cst {dimension_numbers = #tpu.dot_dimension_numbers<[1], [0], [0], [1], [0, 0, 1, 1], [], []>} : vector<8x32xf32>, vector<32x128xf32>, vector<8x128xf32> -> vector<8x128xf32>
    %c0_3 = arith.constant 0 : index
    %c0_4 = arith.constant 0 : index
    %3 = vector.load %arg3[%c0_3, %c0_4] : memref<1x128xf32, #tpu.memory_space<vmem>>, vector<1x128xf32>
    %4 = vector.broadcast %3 : vector<1x128xf32> to vector<8x128xf32>
    %5 = arith.addf %2, %4 : vector<8x128xf32>
    %cst_5 = arith.constant 0.000000e+00 : f32
    %6 = vector.broadcast %cst_5 : f32 to vector<8x128xf32>
    %7 = arith.maximumf %5, %6 : vector<8x128xf32>
    %c0_6 = arith.constant 0 : index
    %c0_7 = arith.constant 0 : index
    %8 = vector.load %arg4[%c0_6, %c0_7] : memref<1x128xf32, #tpu.memory_space<vmem>>, vector<1x128xf32>
    %9 = vector.broadcast %8 : vector<1x128xf32> to vector<8x128xf32>
    %10 = arith.mulf %7, %9 : vector<8x128xf32>
    %cst_8 = arith.constant dense<0.000000e+00> : vector<8xf32>
    %11 = vector.multi_reduction <add>, %10, %cst_8 [1] : vector<8x128xf32> to vector<8xf32>
    %c0_9 = arith.constant 0 : index
    %c0_10 = arith.constant 0 : index
    %12 = memref.load %arg5[%c0_9, %c0_10] : memref<1x1xf32, #tpu.memory_space<smem>>
    %13 = vector.broadcast %12 : f32 to vector<8xf32>
    %14 = arith.addf %11, %13 : vector<8xf32>
    %15 = vector.shape_cast %14 : vector<8xf32> to vector<1x1x8xf32>
    %c0_11 = arith.constant 0 : index
    %c0_12 = arith.constant 0 : index
    %c0_13 = arith.constant 0 : index
    %16 = vector.load %arg6[%c0_11, %c0_12, %c0_13] : memref<1x1x8xf32, #tpu.memory_space<vmem>>, vector<1x1x8xf32>
    tpu.vector_store %arg6[%c0_11, %c0_12, %c0_13], %15 {strides = array<i32>} : memref<1x1x8xf32, #tpu.memory_space<vmem>>, vector<1x1x8xf32>,
    return
  }
  func.func @transform_0(%arg0: i32) -> (i32, i32) {
    %c0_i32 = arith.constant 0 : i32
    %c0_i32_0 = arith.constant 0 : i32
    return %arg0, %c0_i32 : i32, i32
  }
  func.func @transform_1(%arg0: i32) -> (i32, i32) {
    %c0_i32 = arith.constant 0 : i32
    %c0_i32_0 = arith.constant 0 : i32
    %c0_i32_1 = arith.constant 0 : i32
    return %c0_i32, %c0_i32_0 : i32, i32
  }
  func.func @transform_2(%arg0: i32) -> (i32, i32) {
    %c0_i32 = arith.constant 0 : i32
    %c0_i32_0 = arith.constant 0 : i32
    %c0_i32_1 = arith.constant 0 : i32
    return %c0_i32, %c0_i32_0 : i32, i32
  }
  func.func @transform_3(%arg0: i32) -> (i32, i32) {
    %c0_i32 = arith.constant 0 : i32
    %c0_i32_0 = arith.constant 0 : i32
    %c0_i32_1 = arith.constant 0 : i32
    return %c0_i32, %c0_i32_0 : i32, i32
  }
  func.func @transform_4(%arg0: i32) -> (i32, i32) {
    %c0_i32 = arith.constant 0 : i32
    %c0_i32_0 = arith.constant 0 : i32
    %c0_i32_1 = arith.constant 0 : i32
    return %c0_i32, %c0_i32_0 : i32, i32
  }
  func.func @transform_5(%arg0: i32) -> (i32, i32, i32) {
    %c0_i32 = arith.constant 0 : i32
    %c0_i32_0 = arith.constant 0 : i32
    %c0_i32_1 = arith.constant 0 : i32
    return %arg0, %c0_i32, %c0_i32_0 : i32, i32, i32
  }
}

</mosaic_0001>

<llo_original>
// kernel: critic_forward.1
$region0: #{critic_forward.1}
  #allocation0 [shape = 'u32[]', space=smem, size = 0x4, offset = 0x4, fixed_abs, tag = 'smem constant byte address 0x4 - core index']
  #allocation1 [shape = 'u32[144,128]{1,0:T(1,128)}', space=vmem, size = 0x12000, scoped, tag = 'internal scratch']
  #allocation2 [shape = 'f32[1,1]{1,0:T(1,128)S(6)}', space=smem, size = 0x200, scoped, tag = 'scoped memory for critic_forward.1']
  %s0 = inlined_call_operand.vmem [shape: f32[16,32], index: 0, kind: input, shape index: {}]
  %s1 = inlined_call_operand.vmem [shape: f32[32,128], index: 1, kind: input, shape index: {}]
  %s2 = inlined_call_operand.vmem [shape: f32[1,128], index: 2, kind: input, shape index: {}]
  %s3 = inlined_call_operand.vmem [shape: f32[1,128], index: 3, kind: input, shape index: {}]
  %s4 = inlined_call_operand.<no memory space> [shape: f32[1,1], index: 4, kind: input, shape index: {}]
  %s5 = inlined_call_operand.vmem [shape: f32[2,1,8], index: 5, kind: output, shape index: {}]
  %s6 = sld [smem:[#allocation0]]
  $region53: #{critic_forward.1} parent=0
    _
  %s8 = ssub.s32 1, %s6
  %s9 = scalar_select 0, %s8, %s6
  %10 = sst [smem:[#allocation2]] %s4
  loop: start=0, step=1, limit=4
  $region2: #{critic_forward.1} parent=0 // loop_pre_header
    _
  $region3: #{critic_forward.1} parent=0 // loop_header
    %s12 = sphi 0, %s16
    %p13 = scmp.ge.s32.totalorder %s12, 4
    %s22 = sphi 0, %s24
    %s25 = sphi 0, %s22
    %s26 = sphi 0, %s25
    %s42 = sphi 0, %s26
    %s46 = sphi 0, %s46
    %s48 = sphi 0, %s46
    %s49 = sphi 0, %s48
    %s63 = sphi 0, %s49
    %s67 = sphi 0, %s67
    %s69 = sphi 0, %s67
    %s70 = sphi 0, %s69
    %s84 = sphi 0, %s70
    %s88 = sphi 0, %s88
    %s90 = sphi 0, %s88
    %s91 = sphi 0, %s90
    %s105 = sphi 0, %s91
    %s109 = sphi 0, %s109
    %s111 = sphi 0, %s109
    %s112 = sphi 0, %s111
    %s126 = sphi 0, %s112
    %s132 = sphi 0, %s134
    %s135 = sphi 0, %s132
    %s136 = sphi 0, %s135
    %s152 = sphi 0, %s136
  $region4: #{critic_forward.1} parent=0 // loop_header_branch
    %15 = sbr.rel (%p13) target = $region8
  $region5: #{critic_forward.1} parent=0 // loop_body
    %s17 = ssub.s32 %s12, 1
    %s18 = ssub.s32 %s12, 2
    %s19 = sadd.s32 %s12, 1
    %s20 = ssub.s32 %s12, %s19
    %p21 = scmp.eq.s32.totalorder %s20, 0
    %s23 = sadd.s32 %s22, 1
    %s24 = scalar_select %p21, %s22, %s23
    %p27 = pneg %p21
    %p28 = scmp.eq.s32.totalorder %s12, 1
    %p29 = por %p27, %p28
    %p30 = scmp.ne.s32.totalorder %s22, %s25
    %p31 = scmp.eq.s32.totalorder %s12, 0
    %p32 = por %p30, %p31
    %p33 = scmp.ne.s32.totalorder %s22, %s25
    %p34 = scmp.eq.s32.totalorder %s17, 1
    %p35 = por %p33, %p34
    %p36 = scmp.ne.s32.totalorder %s25, %s26
    %p37 = scmp.eq.s32.totalorder %s17, 0
    %p38 = por %p36, %p37
    %p39 = scmp.ne.s32.totalorder %s25, %s26
    %p40 = scmp.eq.s32.totalorder %s18, 1
    %p41 = por %p39, %p40
    %p43 = scmp.ne.s32.totalorder %s26, %s42
    %p44 = scmp.eq.s32.totalorder %s18, 0
    %p45 = por %p43, %p44
    %s47 = sadd.s32 %s46, 1
    %p50 = scmp.eq.s32.totalorder %s12, 1
    %p51 = scmp.ne.s32.totalorder %s46, %s48
    %p52 = scmp.eq.s32.totalorder %s12, 0
    %p53 = por %p51, %p52
    %p54 = scmp.ne.s32.totalorder %s46, %s48
    %p55 = scmp.eq.s32.totalorder %s17, 1
    %p56 = por %p54, %p55
    %p57 = scmp.ne.s32.totalorder %s48, %s49
    %p58 = scmp.eq.s32.totalorder %s17, 0
    %p59 = por %p57, %p58
    %p60 = scmp.ne.s32.totalorder %s48, %s49
    %p61 = scmp.eq.s32.totalorder %s18, 1
    %p62 = por %p60, %p61
    %p64 = scmp.ne.s32.totalorder %s49, %s63
    %p65 = scmp.eq.s32.totalorder %s18, 0
    %p66 = por %p64, %p65
    %s68 = sadd.s32 %s67, 1
    %p71 = scmp.eq.s32.totalorder %s12, 1
    %p72 = scmp.ne.s32.totalorder %s67, %s69
    %p73 = scmp.eq.s32.totalorder %s12, 0
    %p74 = por %p72, %p73
    %p75 = scmp.ne.s32.totalorder %s67, %s69
    %p76 = scmp.eq.s32.totalorder %s17, 1
    %p77 = por %p75, %p76
    %p78 = scmp.ne.s32.totalorder %s69, %s70
    %p79 = scmp.eq.s32.totalorder %s17, 0
    %p80 = por %p78, %p79
    %p81 = scmp.ne.s32.totalorder %s69, %s70
    %p82 = scmp.eq.s32.totalorder %s18, 1
    %p83 = por %p81, %p82
    %p85 = scmp.ne.s32.totalorder %s70, %s84
    %p86 = scmp.eq.s32.totalorder %s18, 0
    %p87 = por %p85, %p86
    %s89 = sadd.s32 %s88, 1
    %p92 = scmp.eq.s32.totalorder %s12, 1
    %p93 = scmp.ne.s32.totalorder %s88, %s90
    %p94 = scmp.eq.s32.totalorder %s12, 0
    %p95 = por %p93, %p94
    %p96 = scmp.ne.s32.totalorder %s88, %s90
    %p97 = scmp.eq.s32.totalorder %s17, 1
    %p98 = por %p96, %p97
    %p99 = scmp.ne.s32.totalorder %s90, %s91
    %p100 = scmp.eq.s32.totalorder %s17, 0
    %p101 = por %p99, %p100
    %p102 = scmp.ne.s32.totalorder %s90, %s91
    %p103 = scmp.eq.s32.totalorder %s18, 1
    %p104 = por %p102, %p103
    %p106 = scmp.ne.s32.totalorder %s91, %s105
    %p107 = scmp.eq.s32.totalorder %s18, 0
    %p108 = por %p106, %p107
    %s110 = sadd.s32 %s109, 1
    %p113 = scmp.eq.s32.totalorder %s12, 1
    %p114 = scmp.ne.s32.totalorder %s109, %s111
    %p115 = scmp.eq.s32.totalorder %s12, 0
    %p116 = por %p114, %p115
    %p117 = scmp.ne.s32.totalorder %s109, %s111
    %p118 = scmp.eq.s32.totalorder %s17, 1
    %p119 = por %p117, %p118
    %p120 = scmp.ne.s32.totalorder %s111, %s112
    %p121 = scmp.eq.s32.totalorder %s17, 0
    %p122 = por %p120, %p121
    %p123 = scmp.ne.s32.totalorder %s111, %s112
    %p124 = scmp.eq.s32.totalorder %s18, 1
    %p125 = por %p123, %p124
    %p127 = scmp.ne.s32.totalorder %s112, %s126
    %p128 = scmp.eq.s32.totalorder %s18, 0
    %p129 = por %p127, %p128
    %s130 = ssub.s32 %s12, %s19
    %p131 = scmp.eq.s32.totalorder %s130, 0
    %s133 = sadd.s32 %s132, 1
    %s134 = scalar_select %p131, %s132, %s133
    %p137 = pneg %p131
    %p138 = scmp.eq.s32.totalorder %s12, 1
    %p139 = por %p137, %p138
    %p140 = scmp.ne.s32.totalorder %s132, %s135
    %p141 = scmp.eq.s32.totalorder %s12, 0
    %p142 = por %p140, %p141
    %p143 = scmp.ne.s32.totalorder %s132, %s135
    %p144 = scmp.eq.s32.totalorder %s17, 1
    %p145 = por %p143, %p144
    %p146 = scmp.ne.s32.totalorder %s135, %s136
    %p147 = scmp.eq.s32.totalorder %s17, 0
    %p148 = por %p146, %p147
    %p149 = scmp.ne.s32.totalorder %s135, %s136
    %p150 = scmp.eq.s32.totalorder %s18, 1
    %p151 = por %p149, %p150
    %p153 = scmp.ne.s32.totalorder %s136, %s152
    %p154 = scmp.eq.s32.totalorder %s18, 0
    %p155 = por %p153, %p154
    %p156 = scmp.le.s32.totalorder 1, %s12
    %p157 = scmp.lt.s32.totalorder %s12, 3
    %p158 = pnand %p156, %p157
    %p159 = pneg %p158
    // Predicated region
    $region9: #{critic_forward.1} parent=5 // pred_check
      _
    $region10: #{critic_forward.1} parent=5 // pred_check_branch
      %161 = sbr.rel (%p158) target = $region12
    $region11: #{critic_forward.1} parent=5 // pred_region
      %s162 = ssub.s32 %s12, 1
      // Predicated region
      $region13: #{critic_forward.1} parent=11 // pred_check
        %p163 = pneg %p59
      $region14: #{critic_forward.1} parent=11 // pred_check_branch
        %165 = sbr.rel (%p163) target = $region16
      $region15: #{critic_forward.1} parent=11 // pred_region
        _
      $region16: #{critic_forward.1} parent=11 // pred_fallthru
        _
      // Predicated region
      $region17: #{critic_forward.1} parent=11 // pred_check
        %p166 = pneg %p80
      $region18: #{critic_forward.1} parent=11 // pred_check_branch
        %168 = sbr.rel (%p166) target = $region20
      $region19: #{critic_forward.1} parent=11 // pred_region
        _
      $region20: #{critic_forward.1} parent=11 // pred_fallthru
        _
      // Predicated region
      $region21: #{critic_forward.1} parent=11 // pred_check
        %p169 = pneg %p101
      $region22: #{critic_forward.1} parent=11 // pred_check_branch
        %171 = sbr.rel (%p169) target = $region24
      $region23: #{critic_forward.1} parent=11 // pred_region
        _
      $region24: #{critic_forward.1} parent=11 // pred_fallthru
        _
      // Predicated region
      $region25: #{critic_forward.1} parent=11 // pred_check
        %p172 = pneg %p122
      $region26: #{critic_forward.1} parent=11 // pred_check_branch
        %174 = sbr.rel (%p172) target = $region28
      $region27: #{critic_forward.1} parent=11 // pred_region
        _
      $region28: #{critic_forward.1} parent=11 // pred_fallthru
        _
    $region12: #{critic_forward.1} parent=5 // pred_fallthru
      _
    %p175 = scmp.lt.s32.totalorder %s12, 2
    // Predicated region
    $region29: #{critic_forward.1} parent=5 // pred_check
      %p176 = pneg %p175
    $region30: #{critic_forward.1} parent=5 // pred_check_branch
      %178 = sbr.rel (%p176) target = $region32
    $region31: #{critic_forward.1} parent=5 // pred_region
      // Predicated region
      $region33: #{critic_forward.1} parent=31 // pred_check
        %p179 = pneg %p32
      $region34: #{critic_forward.1} parent=31 // pred_check_branch
        %181 = sbr.rel (%p179) target = $region36
      $region35: #{critic_forward.1} parent=31 // pred_region
        %p182 = scmp.lt.s32.totalorder %s12, 1
        %s183 = scalar_select %p182, %s12, 1
        %s184 = smul.addr %s183, 8
        %s185 = scalar_lea.vmem %s0, %s184
      $region36: #{critic_forward.1} parent=31 // pred_fallthru
        _
    $region32: #{critic_forward.1} parent=5 // pred_fallthru
      _
    %p186 = scmp.le.s32.totalorder 1, %s12
    %p187 = scmp.lt.s32.totalorder %s12, 3
    %p188 = pnand %p186, %p187
    %p189 = pneg %p188
    // Predicated region
    $region37: #{critic_forward.1} parent=5 // pred_check
      _
    $region38: #{critic_forward.1} parent=5 // pred_check_branch
      %191 = sbr.rel (%p188) target = $region40
    $region39: #{critic_forward.1} parent=5 // pred_region
      %s192 = ssub.s32 %s12, 1
      %p193 = scmp.lt.s32.totalorder %s17, 1
      %s194 = scalar_select %p193, %s17, 1
      %s195 = smul.addr %s194, 8
      %s196 = scalar_lea.vmem %s0, %s195
      %p197 = pneg %p38
      %p198 = pneg %p35
      %p199 = pneg %p59
      %p200 = pneg %p56
      %p201 = pneg %p80
      %p202 = pneg %p77
      %p203 = pneg %p101
      %p204 = pneg %p98
      %p205 = pneg %p122
      %p206 = pneg %p119
      %p207 = pneg %p148
      %p208 = pneg %p145
      %p209 = scmp.lt.s32.totalorder %s17, 1
      %s210 = scalar_select %p209, %s17, 1
      %s211 = scalar_lea.vmem %s5, %s210
      %p212 = scmp.lt.s32.totalorder %s17, 1
      %s213 = scalar_select %p212, %s17, 1
      %s214 = smul.addr %s213, 8
      %s215 = scalar_lea.vmem %s0, %s214
      %p216 = scmp.lt.s32.totalorder %s17, 1
      %s217 = scalar_select %p216, %s17, 1
      %s218 = scalar_lea.vmem %s5, %s217
      %v219 = vld [vmem:[%s1] sm:$0xff]
      %v220 = vld [vmem:[%s1 + $0x8] sm:$0xff]
      %v221 = vld [vmem:[%s1 + $0x10] sm:$0xff]
      %v222 = vld [vmem:[%s1 + $0x18] sm:$0xff]
      %v223 = vld [vmem:[%s215] sm:$0xff]
      %v224 = vld [vmem:[%s2] sm:$0x1]
      %v226 = vlaneseq
      %v227 = vshrl.u32 %v226, 7
      %v228 = vsub.s32 0, %v227
      %v229 = vrot.slane %v224, %v228
      %vm231 = vcmask 261120
      %v233 = vsel %vm231, %v223, 0
      %235 = vmatprep.subr.mxu0 0.0
      %236 = vmatpush1.msra.mxu0 %v219
      %237 = vmatprep.subr.mxu0 0.0
      %238 = vmatpush1.msra.mxu0 %v220
      %239 = vmatprep.subr.mxu0 0.0
      %240 = vmatpush1.msra.mxu0 %v221
      %241 = vmatprep.subr.mxu0 0.0
      %242 = vmatpush1.msra.mxu0 %v222
      %243 = vmatprep.subr.mxu0 0.0
      %244 = vmatpush1.msra.mxu0 0.0
      %245 = vmatprep.subr.mxu0 0.0
      %246 = vmatpush1.msra.mxu0 0.0
      %247 = vmatprep.subr.mxu0 0.0
      %248 = vmatpush1.msra.mxu0 0.0
      %249 = vmatprep.subr.mxu0 0.0
      %250 = vmatpush1.msra.mxu0 0.0
      %251 = vmatprep.subr.mxu0 0.0
      %252 = vmatpush1.msra.mxu0 0.0
      %253 = vmatprep.subr.mxu0 0.0
      %254 = vmatpush1.msra.mxu0 0.0
      %255 = vmatprep.subr.mxu0 0.0
      %256 = vmatpush1.msra.mxu0 0.0
      %257 = vmatprep.subr.mxu0 0.0
      %258 = vmatpush1.msra.mxu0 0.0
      %259 = vmatprep.subr.mxu0 0.0
      %260 = vmatpush1.msra.mxu0 0.0
      %261 = vmatprep.subr.mxu0 0.0
      %262 = vmatpush1.msra.mxu0 0.0
      %263 = vmatprep.subr.mxu0 0.0
      %264 = vmatpush1.msra.mxu0 0.0
      %265 = vmatprep.subr.mxu0 0.0
      %266 = vmatpush1.msra.mxu0 0.0
      %267 = vmatprep.subr.mxu0 0.0
      %268 = vmatpush1.msra.mxu0 0.0
      %269 = vmatprep.subr.mxu0 0.0
      %270 = vmatpush1.msra.mxu0 0.0
      %271 = vmatprep.subr.mxu0 0.0
      %272 = vmatpush1.msra.mxu0 0.0
      %273 = vmatprep.subr.mxu0 0.0
      %274 = vmatpush1.msra.mxu0 0.0
      %275 = vmatprep.subr.mxu0 0.0
      %276 = vmatpush1.msra.mxu0 0.0
      %277 = vmatprep.subr.mxu0 0.0
      %278 = vmatpush1.msra.mxu0 0.0
      %279 = vmatprep.subr.mxu0 0.0
      %280 = vmatpush1.msra.mxu0 0.0
      %281 = vmatprep.subr.mxu0 0.0
      %282 = vmatpush1.msra.mxu0 0.0
      %283 = vmatprep.subr.mxu0 0.0
      %284 = vmatpush1.msra.mxu0 0.0
      %285 = vmatprep.subr.mxu0 0.0
      %286 = vmatpush1.msra.mxu0 0.0
      %287 = vmatprep.subr.mxu0 0.0
      %288 = vmatpush1.msra.mxu0 0.0
      %289 = vmatprep.subr.mxu0 0.0
      %290 = vmatpush1.msra.mxu0 0.0
      %291 = vmatprep.subr.mxu0 0.0
      %292 = vmatpush1.msra.mxu0 0.0
      %293 = vmatprep.subr.mxu0 0.0
      %294 = vmatpush1.msra.mxu0 0.0
      %295 = vmatprep.subr.mxu0 0.0
      %296 = vmatpush1.msra.mxu0 0.0
      %297 = vmatprep.subr.mxu0 0.0
      %298 = vmatpush1.msra.mxu0 0.0
      %299 = vmatprep.mubr.f32.mxu0 0.0
      %300 = vmatmul.mubr.f32.gmra.mrb[0].mxu0 %v233
      %v301 = vpop.f32.mrb[0].mxu0
      %v302 = vadd.f32 %v229, %v301
      %v303 = vpop.f32.mrb[0].mxu0
      %304 = vdwg.mxu0
      %v305 = vmax.f32 %v302, 0.0
      %v306 = vld [vmem:[%s3] sm:$0x1]
      %v308 = vlaneseq
      %v309 = vshrl.u32 %v308, 7
      %v310 = vsub.s32 0, %v309
      %v311 = vrot.slane %v306, %v310
      %v313 = vmul.f32 %v305, %v311
      %314 = vadd.xlane.f32.xlu0 %v313
      %v315 = vpop.xlane.xlu0 %314
      %s316 = sld [smem:[#allocation2]]
      %v317 = vstv %s316
      %v318 = vadd.f32 %v315, %v317
      %v320 = vlaneseq
      %v321 = vand.u32 %v320, 127
      %v322 = vlaneseq
      %v323 = vshrl.u32 %v322, 7
      %v324 = vsub.s32 %v321, %v323
      %v325 = vrot.slane %v318, %v324
      %vm327 = vcmask 57344
      %328 = vst.msk [vmem:[%s218] sm:$0x1] %vm327, %v325
      %p329 = scmp.lt.s32.totalorder %s17, 1
      %s330 = scalar_select %p329, %s17, 1
      %s331 = scalar_lea.vmem %s5, %s330
      // Predicated region
      $region41: #{critic_forward.1} parent=39 // pred_check
        %p332 = pneg %p145
      $region42: #{critic_forward.1} parent=39 // pred_check_branch
        %334 = sbr.rel (%p332) target = $region44
      $region43: #{critic_forward.1} parent=39 // pred_region
        _
      $region44: #{critic_forward.1} parent=39 // pred_fallthru
        _
    $region40: #{critic_forward.1} parent=5 // pred_fallthru
      _
    %p335 = scmp.le.s32.totalorder 2, %s12
    // Predicated region
    $region45: #{critic_forward.1} parent=5 // pred_check
      %p336 = pneg %p335
    $region46: #{critic_forward.1} parent=5 // pred_check_branch
      %338 = sbr.rel (%p336) target = $region48
    $region47: #{critic_forward.1} parent=5 // pred_region
      %s339 = ssub.s32 %s12, 2
      // Predicated region
      $region49: #{critic_forward.1} parent=47 // pred_check
        %p340 = pneg %p151
      $region50: #{critic_forward.1} parent=47 // pred_check_branch
        %342 = sbr.rel (%p340) target = $region52
      $region51: #{critic_forward.1} parent=47 // pred_region
        %p343 = scmp.lt.s32.totalorder %s18, 1
        %s344 = scalar_select %p343, %s18, 1
        %s345 = scalar_lea.vmem %s5, %s344
      $region52: #{critic_forward.1} parent=47 // pred_fallthru
        _
    $region48: #{critic_forward.1} parent=5 // pred_fallthru
      _
  $region6: #{critic_forward.1} parent=0 // loop_footer
    %s16 = sadd.s32 1, %s12
  $region7: #{critic_forward.1} parent=0 // loop_footer_branch
    %11 = sbr.rel target = $region3
  $region8: #{critic_forward.1} parent=0 // loop_exit
    _

</llo_original>
